<compile_context>
chip_gen: v5e
topology: v5e:2x2
jax: 0.10.0
libtpu: 0.0.40
codegen_flags: <defaults>
</compile_context>

<pallas_src>
import jax
import jax.numpy as jnp
from jax.experimental import pallas as pl
from jax.experimental.pallas import tpu as pltpu

NEG_SLOPE = 0.2  # LeakyReLU slope from the config
LANE = 128       # TPU lane width


def _round_up(x, m):
    return (x + m - 1) // m * m


def _pick_tm(batch):
    """Batch tile: >=2 grid steps when possible (v7x megacore), <=1024 rows."""
    if batch <= 8:
        return batch                      # single full-dim block (always legal)
    tm = _round_up(pl.cdiv(batch, 2), 16)  # aim for at least 2 grid steps
    tm = max(8, min(1024, tm))
    tm = min(tm, (batch // 8) * 8)         # keep block rows <= 8-aligned batch
    return tm


def _gan_module_kernel(x_ref, w1_ref, b1_ref, w2_ref, b2_ref, w3_ref, b3_ref,
                       o_ref):
    # Matmul operands in compute_dtype (bf16 recommended); f32 accumulation.
    # Bias add / LeakyReLU / tanh run in f32 (native VPU/EUP path on v5e too).
    x = x_ref[...].astype(w1_ref.dtype)

    # Linear 1 + LeakyReLU(0.2)
    h1 = jnp.dot(x, w1_ref[...], preferred_element_type=jnp.float32) + b1_ref[...]
    h1 = jnp.maximum(h1, NEG_SLOPE * h1)

    # Linear 2 + LeakyReLU(0.2)
    h2 = jnp.dot(h1.astype(w2_ref.dtype), w2_ref[...],
                 preferred_element_type=jnp.float32) + b2_ref[...]
    h2 = jnp.maximum(h2, NEG_SLOPE * h2)

    # Linear 3 + Tanh
    h3 = jnp.dot(h2.astype(w3_ref.dtype), w3_ref[...],
                 preferred_element_type=jnp.float32) + b3_ref[...]
    o_ref[...] = jnp.tanh(h3).astype(o_ref.dtype)


def prepare_params(params, compute_dtype=jnp.bfloat16):
    """Pad weights/biases to lane-dense (multiple-of-128) shapes ONCE.

    Call this at parameter-prep time and reuse the result for every forward;
    padded columns/rows are zero so padded activations stay exactly zero
    through LeakyReLU and contribute nothing downstream.
    Weights are stored as [in_features, out_features] (pre-transposed vs
    PyTorch), so the kernel computes x @ W + b == x @ W_pt.T + b.
    """
    w1, b1, w2, b2, w3, b3 = params
    in_dim, hid = w1.shape
    out_dim = w3.shape[1]
    hid_p = _round_up(hid, LANE)
    out_p = _round_up(out_dim, LANE)
    f32 = jnp.float32

    w1_p = jnp.zeros((in_dim, hid_p), compute_dtype).at[:, :hid].set(
        w1.astype(compute_dtype))
    b1_p = jnp.zeros((1, hid_p), f32).at[:, :hid].set(b1.astype(f32).reshape(1, -1))
    w2_p = jnp.zeros((hid_p, hid_p), compute_dtype).at[:hid, :hid].set(
        w2.astype(compute_dtype))
    b2_p = jnp.zeros((1, hid_p), f32).at[:, :hid].set(b2.astype(f32).reshape(1, -1))
    w3_p = jnp.zeros((hid_p, out_p), compute_dtype).at[:hid, :out_dim].set(
        w3.astype(compute_dtype))
    b3_p = jnp.zeros((1, out_p), f32).at[:, :out_dim].set(b3.astype(f32).reshape(1, -1))

    return {
        "weights": (w1_p, b1_p, w2_p, b2_p, w3_p, b3_p),
        "dims": (in_dim, hid, out_dim),
        "compute_dtype": compute_dtype,
    }


def gan_module_forward(tx, prepared, *, tm=None, out_dtype=None):
    """Fused Pallas forward for the GANModule Sequential stack.

    tx:        [batch, in_dim] activations (any float dtype; cast in-kernel).
    prepared:  output of prepare_params() (padded weights, done once).
    out_dtype: defaults to the compute dtype (bf16 halves output writeback).
    """
    w1_p, b1_p, w2_p, b2_p, w3_p, b3_p = prepared["weights"]
    in_dim, hid, out_dim = prepared["dims"]
    compute_dtype = prepared["compute_dtype"]
    if out_dtype is None:
        out_dtype = compute_dtype

    batch, x_in = tx.shape
    assert x_in == in_dim, "input feature dim mismatch"
    hid_p = w1_p.shape[1]
    out_p = w3_p.shape[1]

    if tm is None:
        tm = _pick_tm(batch)
    grid = (pl.cdiv(batch, tm),)   # ragged last block handled by Pallas

    w_item = jnp.dtype(compute_dtype).itemsize
    o_item = jnp.dtype(out_dtype).itemsize
    x_item = jnp.dtype(tx.dtype).itemsize
    weight_bytes = (in_dim * hid_p + hid_p * hid_p + hid_p * out_p) * w_item
    bias_bytes = (2 * hid_p + out_p) * 4

    # Advisory cost hint for XLA scheduling around the custom call.
    cost = pl.CostEstimate(
        flops=2 * batch * (in_dim * hid_p + hid_p * hid_p + hid_p * out_p),
        transcendentals=batch * out_p,
        bytes_accessed=int(batch * in_dim * x_item + weight_bytes + bias_bytes
                           + batch * out_p * o_item),
    )

    # VMEM budget: resident (single-buffered) weights + double-buffered x/out
    # streams + live f32 intermediates. Only override the scoped limit when we
    # would actually exceed the 32 MiB default (keeps v7x's 64 MiB safe).
    vmem_need = (weight_bytes + bias_bytes
                 + 2 * tm * (in_dim * x_item + out_p * o_item)
                 + 3 * tm * hid_p * 4)
    compiler_kwargs = {"dimension_semantics": ("parallel",)}
    if vmem_need > 24 * 1024 * 1024:
        compiler_kwargs["vmem_limit_bytes"] = int(min(2 * vmem_need,
                                                      96 * 1024 * 1024))

    def build(resident_mode):
        def rspec(shape):
            if resident_mode is None:
                return pl.BlockSpec(shape, lambda i: (0, 0))
            return pl.BlockSpec(shape, lambda i: (0, 0),
                                pipeline_mode=resident_mode)
        return pl.pallas_call(
            _gan_module_kernel,
            out_shape=jax.ShapeDtypeStruct((batch, out_p), out_dtype),
            grid=grid,
            in_specs=[
                pl.BlockSpec((tm, in_dim), lambda i: (i, 0)),  # x: batch-tiled
                rspec((in_dim, hid_p)),                        # w1: resident
                rspec((1, hid_p)),                             # b1: resident
                rspec((hid_p, hid_p)),                         # w2: resident
                rspec((1, hid_p)),                             # b2: resident
                rspec((hid_p, out_p)),                         # w3: resident
                rspec((1, out_p)),                             # b3: resident
            ],
            out_specs=pl.BlockSpec((tm, out_p), lambda i: (i, 0)),
            compiler_params=pltpu.CompilerParams(**compiler_kwargs),
            cost_estimate=cost,
        )

    args = (tx, w1_p, b1_p, w2_p, b2_p, w3_p, b3_p)
    try:
        # Single-buffer the grid-invariant weights/biases (halves their VMEM).
        out_padded = build(pl.Buffered(1))(*args)
    except Exception:
        # Fallback for jax versions without pipeline_mode single-buffering.
        out_padded = build(None)(*args)

    # Strip the lane padding back to the public (batch, out_dim) contract.
    return out_padded[:, :out_dim]


def init_params(key, in_dim, hidden, out_dim):
    """Deterministic synthetic parameter init (shapes match the nn.Linear config)."""
    ks = jax.random.split(key, 6)
    scale = 0.05
    # Stored as [in, out] (transposed relative to PyTorch's [out, in]).
    w1 = scale * jax.random.normal(ks[0], (in_dim, hidden), jnp.float32)
    b1 = scale * jax.random.normal(ks[1], (1, hidden), jnp.float32)
    w2 = scale * jax.random.normal(ks[2], (hidden, hidden), jnp.float32)
    b2 = scale * jax.random.normal(ks[3], (1, hidden), jnp.float32)
    w3 = scale * jax.random.normal(ks[4], (hidden, out_dim), jnp.float32)
    b3 = scale * jax.random.normal(ks[5], (1, out_dim), jnp.float32)
    return (w1, b1, w2, b2, w3, b3)


def reference_forward(tx, params, compute_dtype=jnp.float32):
    """Pure-JAX reference identical to the PyTorch Sequential semantics.

    compute_dtype controls the matmul operand dtype so the bf16 kernel path
    can be checked against an equally-quantized reference.
    """
    w1, b1, w2, b2, w3, b3 = params

    def lin(x, w, b):
        return jnp.dot(x.astype(compute_dtype), w.astype(compute_dtype),
                       preferred_element_type=jnp.float32) + b

    h = lin(tx, w1, b1)
    h = jnp.maximum(h, NEG_SLOPE * h)
    h = lin(h, w2, b2)
    h = jnp.maximum(h, NEG_SLOPE * h)
    h = lin(h, w3, b3)
    return jnp.tanh(h)


if __name__ == "__main__":
    key = jax.random.PRNGKey(0)
    k_x, k_p = jax.random.split(key)

    batch, in_dim, hidden, out_dim = 8, 32, 64, 32
    tx = jax.random.normal(k_x, (batch, in_dim), jnp.float32)
    params = init_params(k_p, in_dim, hidden, out_dim)

    # bf16-operand / bf16-output path (recommended default on v5e/v6e/v7x).
    prep_bf16 = prepare_params(params, compute_dtype=jnp.bfloat16)
    out_bf16 = jax.block_until_ready(gan_module_forward(tx, prep_bf16))
    ref_bf16 = reference_forward(tx, params, compute_dtype=jnp.bfloat16)
    assert out_bf16.shape == (batch, out_dim)
    assert out_bf16.dtype == jnp.bfloat16
    assert jnp.allclose(out_bf16.astype(jnp.float32), ref_bf16,
                        atol=2e-2, rtol=2e-2), "Pallas bf16 output mismatch"

    # Full-f32 path (exact check against the PyTorch-equivalent reference).
    prep_f32 = prepare_params(params, compute_dtype=jnp.float32)
    out_f32 = jax.block_until_ready(
        gan_module_forward(tx, prep_f32, out_dtype=jnp.float32))
    ref_f32 = reference_forward(tx, params, compute_dtype=jnp.float32)
    assert jnp.allclose(out_f32, ref_f32, atol=1e-5, rtol=1e-5), \
        "Pallas f32 output mismatch"

    print("KERNEL_OK")
</pallas_src>

<mosaic_0001>
module attributes {stable_mosaic.version = 11 : i64} {
  func.func @_gan_module_kernel(%arg0: i32, %arg1: memref<8x32xf32, #tpu.memory_space<vmem>>, %arg2: memref<32x128xbf16, #tpu.memory_space<vmem>>, %arg3: memref<1x128xf32, #tpu.memory_space<vmem>>, %arg4: memref<128x128xbf16, #tpu.memory_space<vmem>>, %arg5: memref<1x128xf32, #tpu.memory_space<vmem>>, %arg6: memref<128x128xbf16, #tpu.memory_space<vmem>>, %arg7: memref<1x128xf32, #tpu.memory_space<vmem>>, %arg8: memref<8x128xbf16, #tpu.memory_space<vmem>>) attributes {dimension_semantics = [#tpu.dimension_semantics<parallel>], iteration_bounds = array<i64: 1>, scalar_prefetch = 0 : i64, scratch_operands = 0 : i64, tpu.core_type = #tpu.core_type<tc>, window_params = [{transform_indices = @transform_0, window_bounds = array<i64: 8, 32>}, {pipeline_mode = #tpu.pipeline_mode<synchronous>, transform_indices = @transform_1, window_bounds = array<i64: 32, 128>}, {pipeline_mode = #tpu.pipeline_mode<synchronous>, transform_indices = @transform_2, window_bounds = array<i64: 1, 128>}, {pipeline_mode = #tpu.pipeline_mode<synchronous>, transform_indices = @transform_3, window_bounds = array<i64: 128, 128>}, {pipeline_mode = #tpu.pipeline_mode<synchronous>, transform_indices = @transform_4, window_bounds = array<i64: 1, 128>}, {pipeline_mode = #tpu.pipeline_mode<synchronous>, transform_indices = @transform_5, window_bounds = array<i64: 128, 128>}, {pipeline_mode = #tpu.pipeline_mode<synchronous>, transform_indices = @transform_6, window_bounds = array<i64: 1, 128>}, {transform_indices = @transform_7, window_bounds = array<i64: 8, 128>}]} {
    %c0 = arith.constant 0 : index
    %c0_0 = arith.constant 0 : index
    %0 = vector.load %arg1[%c0, %c0_0] : memref<8x32xf32, #tpu.memory_space<vmem>>, vector<8x32xf32>
    %1 = arith.truncf %0 : vector<8x32xf32> to vector<8x32xbf16>
    %c0_1 = arith.constant 0 : index
    %c0_2 = arith.constant 0 : index
    %2 = vector.load %arg2[%c0_1, %c0_2] : memref<32x128xbf16, #tpu.memory_space<vmem>>, vector<32x128xbf16>
    %cst = arith.constant dense<0.000000e+00> : vector<8x128xf32>
    %3 = tpu.matmul %1, %2, %cst {dimension_numbers = #tpu.dot_dimension_numbers<[1], [0], [0], [1], [0, 0, 1, 1], [], []>} : vector<8x32xbf16>, vector<32x128xbf16>, vector<8x128xf32> -> vector<8x128xf32>
    %c0_3 = arith.constant 0 : index
    %c0_4 = arith.constant 0 : index
    %4 = vector.load %arg3[%c0_3, %c0_4] : memref<1x128xf32, #tpu.memory_space<vmem>>, vector<1x128xf32>
    %5 = vector.broadcast %4 : vector<1x128xf32> to vector<8x128xf32>
    %6 = arith.addf %3, %5 : vector<8x128xf32>
    %cst_5 = arith.constant 2.000000e-01 : f32
    %7 = vector.broadcast %cst_5 : f32 to vector<8x128xf32>
    %8 = arith.mulf %7, %6 : vector<8x128xf32>
    %9 = arith.maximumf %6, %8 : vector<8x128xf32>
    %10 = arith.truncf %9 : vector<8x128xf32> to vector<8x128xbf16>
    %c0_6 = arith.constant 0 : index
    %c0_7 = arith.constant 0 : index
    %11 = vector.load %arg4[%c0_6, %c0_7] : memref<128x128xbf16, #tpu.memory_space<vmem>>, vector<128x128xbf16>
    %cst_8 = arith.constant dense<0.000000e+00> : vector<8x128xf32>
    %12 = tpu.matmul %10, %11, %cst_8 {dimension_numbers = #tpu.dot_dimension_numbers<[1], [0], [0], [1], [0, 0, 1, 1], [], []>} : vector<8x128xbf16>, vector<128x128xbf16>, vector<8x128xf32> -> vector<8x128xf32>
    %c0_9 = arith.constant 0 : index
    %c0_10 = arith.constant 0 : index
    %13 = vector.load %arg5[%c0_9, %c0_10] : memref<1x128xf32, #tpu.memory_space<vmem>>, vector<1x128xf32>
    %14 = vector.broadcast %13 : vector<1x128xf32> to vector<8x128xf32>
    %15 = arith.addf %12, %14 : vector<8x128xf32>
    %cst_11 = arith.constant 2.000000e-01 : f32
    %16 = vector.broadcast %cst_11 : f32 to vector<8x128xf32>
    %17 = arith.mulf %16, %15 : vector<8x128xf32>
    %18 = arith.maximumf %15, %17 : vector<8x128xf32>
    %19 = arith.truncf %18 : vector<8x128xf32> to vector<8x128xbf16>
    %c0_12 = arith.constant 0 : index
    %c0_13 = arith.constant 0 : index
    %20 = vector.load %arg6[%c0_12, %c0_13] : memref<128x128xbf16, #tpu.memory_space<vmem>>, vector<128x128xbf16>
    %cst_14 = arith.constant dense<0.000000e+00> : vector<8x128xf32>
    %21 = tpu.matmul %19, %20, %cst_14 {dimension_numbers = #tpu.dot_dimension_numbers<[1], [0], [0], [1], [0, 0, 1, 1], [], []>} : vector<8x128xbf16>, vector<128x128xbf16>, vector<8x128xf32> -> vector<8x128xf32>
    %c0_15 = arith.constant 0 : index
    %c0_16 = arith.constant 0 : index
    %22 = vector.load %arg7[%c0_15, %c0_16] : memref<1x128xf32, #tpu.memory_space<vmem>>, vector<1x128xf32>
    %23 = vector.broadcast %22 : vector<1x128xf32> to vector<8x128xf32>
    %24 = arith.addf %21, %23 : vector<8x128xf32>
    %25 = math.tanh %24 : vector<8x128xf32>
    %26 = arith.truncf %25 : vector<8x128xf32> to vector<8x128xbf16>
    %c0_17 = arith.constant 0 : index
    %c0_18 = arith.constant 0 : index
    %27 = vector.load %arg8[%c0_17, %c0_18] : memref<8x128xbf16, #tpu.memory_space<vmem>>, vector<8x128xbf16>
    tpu.vector_store %arg8[%c0_17, %c0_18], %26 {strides = array<i32>} : memref<8x128xbf16, #tpu.memory_space<vmem>>, vector<8x128xbf16>,
    return
  }
  func.func @transform_0(%arg0: i32) -> (i32, i32) {
    %c0_i32 = arith.constant 0 : i32
    %c0_i32_0 = arith.constant 0 : i32
    return %arg0, %c0_i32 : i32, i32
  }
  func.func @transform_1(%arg0: i32) -> (i32, i32) {
    %c0_i32 = arith.constant 0 : i32
    %c0_i32_0 = arith.constant 0 : i32
    %c0_i32_1 = arith.constant 0 : i32
    return %c0_i32, %c0_i32_0 : i32, i32
  }
  func.func @transform_2(%arg0: i32) -> (i32, i32) {
    %c0_i32 = arith.constant 0 : i32
    %c0_i32_0 = arith.constant 0 : i32
    %c0_i32_1 = arith.constant 0 : i32
    return %c0_i32, %c0_i32_0 : i32, i32
  }
  func.func @transform_3(%arg0: i32) -> (i32, i32) {
    %c0_i32 = arith.constant 0 : i32
    %c0_i32_0 = arith.constant 0 : i32
    %c0_i32_1 = arith.constant 0 : i32
    return %c0_i32, %c0_i32_0 : i32, i32
  }
  func.func @transform_4(%arg0: i32) -> (i32, i32) {
    %c0_i32 = arith.constant 0 : i32
    %c0_i32_0 = arith.constant 0 : i32
    %c0_i32_1 = arith.constant 0 : i32
    return %c0_i32, %c0_i32_0 : i32, i32
  }
  func.func @transform_5(%arg0: i32) -> (i32, i32) {
    %c0_i32 = arith.constant 0 : i32
    %c0_i32_0 = arith.constant 0 : i32
    %c0_i32_1 = arith.constant 0 : i32
    return %c0_i32, %c0_i32_0 : i32, i32
  }
  func.func @transform_6(%arg0: i32) -> (i32, i32) {
    %c0_i32 = arith.constant 0 : i32
    %c0_i32_0 = arith.constant 0 : i32
    %c0_i32_1 = arith.constant 0 : i32
    return %c0_i32, %c0_i32_0 : i32, i32
  }
  func.func @transform_7(%arg0: i32) -> (i32, i32) {
    %c0_i32 = arith.constant 0 : i32
    %c0_i32_0 = arith.constant 0 : i32
    return %arg0, %c0_i32 : i32, i32
  }
}

module attributes {stable_mosaic.version = 11 : i64} {
  func.func @_gan_module_kernel(%arg0: i32, %arg1: memref<8x32xf32, #tpu.memory_space<vmem>>, %arg2: memref<32x128xbf16, #tpu.memory_space<vmem>>, %arg3: memref<1x128xf32, #tpu.memory_space<vmem>>, %arg4: memref<128x128xbf16, #tpu.memory_space<vmem>>, %arg5: memref<1x128xf32, #tpu.memory_space<vmem>>, %arg6: memref<128x128xbf16, #tpu.memory_space<vmem>>, %arg7: memref<1x128xf32, #tpu.memory_space<vmem>>, %arg8: memref<8x128xbf16, #tpu.memory_space<vmem>>) attributes {dimension_semantics = [#tpu.dimension_semantics<parallel>], iteration_bounds = array<i64: 1>, scalar_prefetch = 0 : i64, scratch_operands = 0 : i64, tpu.core_type = #tpu.core_type<tc>, window_params = [{transform_indices = @transform_0, window_bounds = array<i64: 8, 32>}, {pipeline_mode = #tpu.pipeline_mode<synchronous>, transform_indices = @transform_1, window_bounds = array<i64: 32, 128>}, {pipeline_mode = #tpu.pipeline_mode<synchronous>, transform_indices = @transform_2, window_bounds = array<i64: 1, 128>}, {pipeline_mode = #tpu.pipeline_mode<synchronous>, transform_indices = @transform_3, window_bounds = array<i64: 128, 128>}, {pipeline_mode = #tpu.pipeline_mode<synchronous>, transform_indices = @transform_4, window_bounds = array<i64: 1, 128>}, {pipeline_mode = #tpu.pipeline_mode<synchronous>, transform_indices = @transform_5, window_bounds = array<i64: 128, 128>}, {pipeline_mode = #tpu.pipeline_mode<synchronous>, transform_indices = @transform_6, window_bounds = array<i64: 1, 128>}, {transform_indices = @transform_7, window_bounds = array<i64: 8, 128>}]} {
    %c0 = arith.constant 0 : index
    %c0_0 = arith.constant 0 : index
    %0 = vector.load %arg1[%c0, %c0_0] : memref<8x32xf32, #tpu.memory_space<vmem>>, vector<8x32xf32>
    %1 = arith.truncf %0 : vector<8x32xf32> to vector<8x32xbf16>
    %c0_1 = arith.constant 0 : index
    %c0_2 = arith.constant 0 : index
    %2 = vector.load %arg2[%c0_1, %c0_2] : memref<32x128xbf16, #tpu.memory_space<vmem>>, vector<32x128xbf16>
    %cst = arith.constant dense<0.000000e+00> : vector<8x128xf32>
    %3 = tpu.matmul %1, %2, %cst {dimension_numbers = #tpu.dot_dimension_numbers<[1], [0], [0], [1], [0, 0, 1, 1], [], []>} : vector<8x32xbf16>, vector<32x128xbf16>, vector<8x128xf32> -> vector<8x128xf32>
    %c0_3 = arith.constant 0 : index
    %c0_4 = arith.constant 0 : index
    %4 = vector.load %arg3[%c0_3, %c0_4] : memref<1x128xf32, #tpu.memory_space<vmem>>, vector<1x128xf32>
    %5 = vector.broadcast %4 : vector<1x128xf32> to vector<8x128xf32>
    %6 = arith.addf %3, %5 : vector<8x128xf32>
    %cst_5 = arith.constant 2.000000e-01 : f32
    %7 = vector.broadcast %cst_5 : f32 to vector<8x128xf32>
    %8 = arith.mulf %7, %6 : vector<8x128xf32>
    %9 = arith.maximumf %6, %8 : vector<8x128xf32>
    %10 = arith.truncf %9 : vector<8x128xf32> to vector<8x128xbf16>
    %c0_6 = arith.constant 0 : index
    %c0_7 = arith.constant 0 : index
    %11 = vector.load %arg4[%c0_6, %c0_7] : memref<128x128xbf16, #tpu.memory_space<vmem>>, vector<128x128xbf16>
    %cst_8 = arith.constant dense<0.000000e+00> : vector<8x128xf32>
    %12 = tpu.matmul %10, %11, %cst_8 {dimension_numbers = #tpu.dot_dimension_numbers<[1], [0], [0], [1], [0, 0, 1, 1], [], []>} : vector<8x128xbf16>, vector<128x128xbf16>, vector<8x128xf32> -> vector<8x128xf32>
    %c0_9 = arith.constant 0 : index
    %c0_10 = arith.constant 0 : index
    %13 = vector.load %arg5[%c0_9, %c0_10] : memref<1x128xf32, #tpu.memory_space<vmem>>, vector<1x128xf32>
    %14 = vector.broadcast %13 : vector<1x128xf32> to vector<8x128xf32>
    %15 = arith.addf %12, %14 : vector<8x128xf32>
    %cst_11 = arith.constant 2.000000e-01 : f32
    %16 = vector.broadcast %cst_11 : f32 to vector<8x128xf32>
    %17 = arith.mulf %16, %15 : vector<8x128xf32>
    %18 = arith.maximumf %15, %17 : vector<8x128xf32>
    %19 = arith.truncf %18 : vector<8x128xf32> to vector<8x128xbf16>
    %c0_12 = arith.constant 0 : index
    %c0_13 = arith.constant 0 : index
    %20 = vector.load %arg6[%c0_12, %c0_13] : memref<128x128xbf16, #tpu.memory_space<vmem>>, vector<128x128xbf16>
    %cst_14 = arith.constant dense<0.000000e+00> : vector<8x128xf32>
    %21 = tpu.matmul %19, %20, %cst_14 {dimension_numbers = #tpu.dot_dimension_numbers<[1], [0], [0], [1], [0, 0, 1, 1], [], []>} : vector<8x128xbf16>, vector<128x128xbf16>, vector<8x128xf32> -> vector<8x128xf32>
    %c0_15 = arith.constant 0 : index
    %c0_16 = arith.constant 0 : index
    %22 = vector.load %arg7[%c0_15, %c0_16] : memref<1x128xf32, #tpu.memory_space<vmem>>, vector<1x128xf32>
    %23 = vector.broadcast %22 : vector<1x128xf32> to vector<8x128xf32>
    %24 = arith.addf %21, %23 : vector<8x128xf32>
    %25 = math.tanh %24 : vector<8x128xf32>
    %26 = arith.truncf %25 : vector<8x128xf32> to vector<8x128xbf16>
    %c0_17 = arith.constant 0 : index
    %c0_18 = arith.constant 0 : index
    %27 = vector.load %arg8[%c0_17, %c0_18] : memref<8x128xbf16, #tpu.memory_space<vmem>>, vector<8x128xbf16>
    tpu.vector_store %arg8[%c0_17, %c0_18], %26 {strides = array<i32>} : memref<8x128xbf16, #tpu.memory_space<vmem>>, vector<8x128xbf16>,
    return
  }
  func.func @transform_0(%arg0: i32) -> (i32, i32) {
    %c0_i32 = arith.constant 0 : i32
    %c0_i32_0 = arith.constant 0 : i32
    return %arg0, %c0_i32 : i32, i32
  }
  func.func @transform_1(%arg0: i32) -> (i32, i32) {
    %c0_i32 = arith.constant 0 : i32
    %c0_i32_0 = arith.constant 0 : i32
    %c0_i32_1 = arith.constant 0 : i32
    return %c0_i32, %c0_i32_0 : i32, i32
  }
  func.func @transform_2(%arg0: i32) -> (i32, i32) {
    %c0_i32 = arith.constant 0 : i32
    %c0_i32_0 = arith.constant 0 : i32
    %c0_i32_1 = arith.constant 0 : i32
    return %c0_i32, %c0_i32_0 : i32, i32
  }
  func.func @transform_3(%arg0: i32) -> (i32, i32) {
    %c0_i32 = arith.constant 0 : i32
    %c0_i32_0 = arith.constant 0 : i32
    %c0_i32_1 = arith.constant 0 : i32
    return %c0_i32, %c0_i32_0 : i32, i32
  }
  func.func @transform_4(%arg0: i32) -> (i32, i32) {
    %c0_i32 = arith.constant 0 : i32
    %c0_i32_0 = arith.constant 0 : i32
    %c0_i32_1 = arith.constant 0 : i32
    return %c0_i32, %c0_i32_0 : i32, i32
  }
  func.func @transform_5(%arg0: i32) -> (i32, i32) {
    %c0_i32 = arith.constant 0 : i32
    %c0_i32_0 = arith.constant 0 : i32
    %c0_i32_1 = arith.constant 0 : i32
    return %c0_i32, %c0_i32_0 : i32, i32
  }
  func.func @transform_6(%arg0: i32) -> (i32, i32) {
    %c0_i32 = arith.constant 0 : i32
    %c0_i32_0 = arith.constant 0 : i32
    %c0_i32_1 = arith.constant 0 : i32
    return %c0_i32, %c0_i32_0 : i32, i32
  }
  func.func @transform_7(%arg0: i32) -> (i32, i32) {
    %c0_i32 = arith.constant 0 : i32
    %c0_i32_0 = arith.constant 0 : i32
    return %arg0, %c0_i32 : i32, i32
  }
}

</mosaic_0001>

<llo_original>
// kernel: tpu_custom_call.1
$region0: #{tpu_custom_call.1}
  #allocation0 [shape = 'u32[]', space=smem, size = 0x4, offset = 0x4, fixed_abs, tag = 'smem constant byte address 0x4 - core index']
  #allocation1 [shape = 'u32[72,128]{1,0:T(1,128)}', space=vmem, size = 0x9000, scoped, tag = 'internal scratch']
  %s0 = inlined_call_operand.hbm [shape: f32[8,32], index: 0, kind: input, shape index: {}]
  %s1 = inlined_call_operand.hbm [shape: bf16[32,128], index: 1, kind: input, shape index: {}]
  %s2 = inlined_call_operand.vmem [shape: f32[1,128], index: 2, kind: input, shape index: {}]
  %s3 = inlined_call_operand.hbm [shape: bf16[128,128], index: 3, kind: input, shape index: {}]
  %s4 = inlined_call_operand.vmem [shape: f32[1,128], index: 4, kind: input, shape index: {}]
  %s5 = inlined_call_operand.hbm [shape: bf16[128,128], index: 5, kind: input, shape index: {}]
  %s6 = inlined_call_operand.vmem [shape: f32[1,128], index: 6, kind: input, shape index: {}]
  %s7 = inlined_call_operand.hbm [shape: bf16[8,128], index: 7, kind: output, shape index: {}]
  %s8 = sld [smem:[#allocation0]]
  $region54: #{tpu_custom_call.1} parent=0
    _
  %s10 = ssub.s32 1, %s8
  %s11 = scalar_select 0, %s10, %s8
  $region1: #{tpu_custom_call.1} parent=0
    #allocation2 [shape = 'u8[4096]{0}', space=vmem, size = 0x1000, scoped, tag = 'input window, operand 0, single buffered']
    #allocation3 [shape = 's32[1]{0}', space=sflag, size = 0x4, scoped, tag = 'scoped memory for tpu_custom_call.1']
    #allocation4 [shape = 's32[1]{0}', space=sflag, size = 0x4, scoped, tag = 'scoped memory for tpu_custom_call.1']
    #allocation5 [shape = 'u8[8192]{0}', space=vmem, size = 0x2000, scoped, tag = 'input window, operand 1, single buffered']
    #allocation6 [shape = 's32[1]{0}', space=sflag, size = 0x4, scoped, tag = 'scoped memory for tpu_custom_call.1']
    #allocation7 [shape = 'u8[32768]{0}', space=vmem, size = 0x8000, scoped, tag = 'input window, operand 3, single buffered']
    #allocation8 [shape = 'u8[32768]{0}', space=vmem, size = 0x8000, scoped, tag = 'input window, operand 5, single buffered']
    #allocation9 [shape = 's32[1]{0}', space=sflag, size = 0x4, scoped, tag = 'scoped memory for tpu_custom_call.1']
    #allocation10 [shape = 'u8[2048]{0}', space=vmem, size = 0x800, scoped, tag = 'output window, operand 0, single buffered']
    %12 = vsyncpa [#allocation3], 0
    %13 = vsyncpa [#allocation6], 0
    %14 = vsyncpa [#allocation9], 0
    %15 = vsyncpa [#allocation4], 0
    // Predicated region
    $region2: #{tpu_custom_call.1} parent=1 // pred_check
      _
    $region3: #{tpu_custom_call.1} parent=1 // pred_check_branch
      %17 = sbr.rel (0) target = $region5
    $region4: #{tpu_custom_call.1} parent=1 // pred_region
      %19 = vsyncadd [#allocation3], 0
      %s21 = sshll.u32 %s0, 4
      %s22 = int_to_ptr.hbm [resolvable:$true] %s21
      %s23 = sshll.u32 [#allocation2], 4
      %s24 = int_to_ptr.vmem [resolvable:$true] %s23
      %26 = dma.hbm_to_vmem [thread:$0]  %s22, 128, %s24, [#allocation3]
    $region5: #{tpu_custom_call.1} parent=1 // pred_fallthru
      _
    // Predicated region
    $region6: #{tpu_custom_call.1} parent=1 // pred_check
      _
    $region7: #{tpu_custom_call.1} parent=1 // pred_check_branch
      %28 = sbr.rel (0) target = $region9
    $region8: #{tpu_custom_call.1} parent=1 // pred_region
      %30 = vsyncadd [#allocation6], 0
      %s31 = sshll.u32 %s1, 4
      %s32 = int_to_ptr.hbm [resolvable:$true] %s31
      %s33 = sshll.u32 [#allocation5], 4
      %s34 = int_to_ptr.vmem [resolvable:$true] %s33
      %39 = dma.hbm_to_vmem [thread:$0]  %s32, 256, %s34, [#allocation6], 64, 64, 4
    $region9: #{tpu_custom_call.1} parent=1 // pred_fallthru
      _
    // Predicated region
    $region10: #{tpu_custom_call.1} parent=1 // pred_check
      _
    $region11: #{tpu_custom_call.1} parent=1 // pred_check_branch
      %41 = sbr.rel (0) target = $region13
    $region12: #{tpu_custom_call.1} parent=1 // pred_region
      _
    $region13: #{tpu_custom_call.1} parent=1 // pred_fallthru
      _
    // Predicated region
    $region14: #{tpu_custom_call.1} parent=1 // pred_check
      _
    $region15: #{tpu_custom_call.1} parent=1 // pred_check_branch
      %43 = sbr.rel (0) target = $region17
    $region16: #{tpu_custom_call.1} parent=1 // pred_region
      %45 = vsyncadd [#allocation6], 0
      %s46 = sshll.u32 %s3, 4
      %s47 = int_to_ptr.hbm [resolvable:$true] %s46
      %s48 = sshll.u32 [#allocation7], 4
      %s49 = int_to_ptr.vmem [resolvable:$true] %s48
      %54 = dma.hbm_to_vmem [thread:$0]  %s47, 1024, %s49, [#allocation6], 64, 64, 4
    $region17: #{tpu_custom_call.1} parent=1 // pred_fallthru
      _
    // Predicated region
    $region18: #{tpu_custom_call.1} parent=1 // pred_check
      _
    $region19: #{tpu_custom_call.1} parent=1 // pred_check_branch
      %56 = sbr.rel (0) target = $region21
    $region20: #{tpu_custom_call.1} parent=1 // pred_region
      _
    $region21: #{tpu_custom_call.1} parent=1 // pred_fallthru
      _
    // Predicated region
    $region22: #{tpu_custom_call.1} parent=1 // pred_check
      _
    $region23: #{tpu_custom_call.1} parent=1 // pred_check_branch
      %58 = sbr.rel (0) target = $region25
    $region24: #{tpu_custom_call.1} parent=1 // pred_region
      %60 = vsyncadd [#allocation9], 0
      %s61 = sshll.u32 %s5, 4
      %s62 = int_to_ptr.hbm [resolvable:$true] %s61
      %s63 = sshll.u32 [#allocation8], 4
      %s64 = int_to_ptr.vmem [resolvable:$true] %s63
      %69 = dma.hbm_to_vmem [thread:$0]  %s62, 1024, %s64, [#allocation9], 64, 64, 4
    $region25: #{tpu_custom_call.1} parent=1 // pred_fallthru
      _
    // Predicated region
    $region26: #{tpu_custom_call.1} parent=1 // pred_check
      _
    $region27: #{tpu_custom_call.1} parent=1 // pred_check_branch
      %71 = sbr.rel (0) target = $region29
    $region28: #{tpu_custom_call.1} parent=1 // pred_region
      _
    $region29: #{tpu_custom_call.1} parent=1 // pred_fallthru
      _
    // Predicated region
    $region30: #{tpu_custom_call.1} parent=1 // pred_check
      _
    $region31: #{tpu_custom_call.1} parent=1 // pred_check_branch
      %73 = sbr.rel (0) target = $region33
    $region32: #{tpu_custom_call.1} parent=1 // pred_region
      %75 = dma.done [#allocation3], 128
    $region33: #{tpu_custom_call.1} parent=1 // pred_fallthru
      _
    // Predicated region
    $region34: #{tpu_custom_call.1} parent=1 // pred_check
      _
    $region35: #{tpu_custom_call.1} parent=1 // pred_check_branch
      %77 = sbr.rel (0) target = $region37
    $region36: #{tpu_custom_call.1} parent=1 // pred_region
      %79 = dma.done [#allocation6], 256
    $region37: #{tpu_custom_call.1} parent=1 // pred_fallthru
      _
    // Predicated region
    $region38: #{tpu_custom_call.1} parent=1 // pred_check
      _
    $region39: #{tpu_custom_call.1} parent=1 // pred_check_branch
      %81 = sbr.rel (0) target = $region41
    $region40: #{tpu_custom_call.1} parent=1 // pred_region
      %83 = dma.done [#allocation6], 1024
    $region41: #{tpu_custom_call.1} parent=1 // pred_fallthru
      _
    // Predicated region
    $region42: #{tpu_custom_call.1} parent=1 // pred_check
      _
    $region43: #{tpu_custom_call.1} parent=1 // pred_check_branch
      %85 = sbr.rel (0) target = $region45
    $region44: #{tpu_custom_call.1} parent=1 // pred_region
      %87 = dma.done [#allocation9], 1024
    $region45: #{tpu_custom_call.1} parent=1 // pred_fallthru
      _
    %v89 = vld [vmem:[#allocation2] sm:$0xff]
    %v90 = vpack.c.bf16 %v89, %v89
    %v91 = vld [vmem:[#allocation5] sm:$0xf]
    %v92 = vld [vmem:[#allocation5 + $0x4] sm:$0xf]
    %v93 = vld [vmem:[#allocation5 + $0x8] sm:$0xf]
    %v94 = vld [vmem:[#allocation5 + $0xc] sm:$0xf]
    %v95 = vld [vmem:[%s2] sm:$0x1]
    %v97 = vperm.slane %v95, 0
    %v103 = vunpack.c.l.b16 %v91
    %v104 = vunpack.c.l.b16 %v92
    %v105 = vunpack.c.l.b16 %v93
    %v106 = vunpack.c.l.b16 %v94
    %v107 = vpack.c.b16 %v104, %v103
    %v108 = vpack.c.b16 %v106, %v105
    %vm111 = vcmask 261120
    %v113 = vsel %vm111, %v90, 0
    %115 = vmatpush.bf16.msra.mxu0 0
    %116 = vmatpush.bf16.msra.mxu0 0
    %117 = vmatpush.bf16.msra.mxu0 0
    %118 = vmatpush.bf16.msra.mxu0 0
    %119 = vmatpush.bf16.msra.mxu0 0
    %120 = vmatpush.bf16.msra.mxu0 0
    %121 = vmatpush.bf16.msra.mxu0 %v108
    %122 = vmatpush.bf16.msra.mxu0 %v107
    %123 = vmatmul.bf16.gmra.mxu0 %v113
    %v124 = vpop.f32.mrf.mxu0
    %v125 = vadd.f32 %v97, %v124
    %v126 = vpop.f32.mrf.mxu0
    %127 = vdwg.mxu0
    %v128 = vmul.f32 %v125, 0.2
    %v129 = vmax.f32 %v125, %v128
    %v130 = vpack.c.bf16 %v129, %v129
    %v131 = vld [vmem:[#allocation7] sm:$0xf]
    %v132 = vld [vmem:[#allocation7 + $0x4] sm:$0xf]
    %v133 = vld [vmem:[#allocation7 + $0x8] sm:$0xf]
    %v134 = vld [vmem:[#allocation7 + $0xc] sm:$0xf]
    %v135 = vld [vmem:[#allocation7 + $0x10] sm:$0xf]
    %v136 = vld [vmem:[#allocation7 + $0x14] sm:$0xf]
    %v137 = vld [vmem:[#allocation7 + $0x18] sm:$0xf]
    %v138 = vld [vmem:[#allocation7 + $0x1c] sm:$0xf]
    %v139 = vld [vmem:[#allocation7 + $0x20] sm:$0xf]
    %v140 = vld [vmem:[#allocation7 + $0x24] sm:$0xf]
    %v141 = vld [vmem:[#allocation7 + $0x28] sm:$0xf]
    %v142 = vld [vmem:[#allocation7 + $0x2c] sm:$0xf]
    %v143 = vld [vmem:[#allocation7 + $0x30] sm:$0xf]
    %v144 = vld [vmem:[#allocation7 + $0x34] sm:$0xf]
    %v145 = vld [vmem:[#allocation7 + $0x38] sm:$0xf]
    %v146 = vld [vmem:[#allocation7 + $0x3c] sm:$0xf]
    %v147 = vld [vmem:[%s4] sm:$0x1]
    %v149 = vperm.slane %v147, 0
    %v167 = vunpack.c.l.b16 %v131
    %v168 = vunpack.c.l.b16 %v132
    %v169 = vunpack.c.l.b16 %v133
    %v170 = vunpack.c.l.b16 %v134
    %v171 = vunpack.c.l.b16 %v135
    %v172 = vunpack.c.l.b16 %v136
    %v173 = vunpack.c.l.b16 %v137
    %v174 = vunpack.c.l.b16 %v138
    %v175 = vunpack.c.l.b16 %v139
    %v176 = vunpack.c.l.b16 %v140
    %v177 = vunpack.c.l.b16 %v141
    %v178 = vunpack.c.l.b16 %v142
    %v179 = vunpack.c.l.b16 %v143
    %v180 = vunpack.c.l.b16 %v144
    %v181 = vunpack.c.l.b16 %v145
    %v182 = vunpack.c.l.b16 %v146
    %v183 = vpack.c.b16 %v168, %v167
    %v184 = vpack.c.b16 %v170, %v169
    %v185 = vpack.c.b16 %v172, %v171
    %v186 = vpack.c.b16 %v174, %v173
    %v187 = vpack.c.b16 %v176, %v175
    %v188 = vpack.c.b16 %v178, %v177
    %v189 = vpack.c.b16 %v180, %v179
    %v190 = vpack.c.b16 %v182, %v181
    %199 = vmatpush.bf16.msra.mxu0 %v190
    %200 = vmatpush.bf16.msra.mxu0 %v189
    %201 = vmatpush.bf16.msra.mxu0 %v188
    %202 = vmatpush.bf16.msra.mxu0 %v187
    %203 = vmatpush.bf16.msra.mxu0 %v186
    %204 = vmatpush.bf16.msra.mxu0 %v185
    %205 = vmatpush.bf16.msra.mxu0 %v184
    %206 = vmatpush.bf16.msra.mxu0 %v183
    %207 = vmatmul.bf16.gmra.mxu0 %v130
    %v208 = vpop.f32.mrf.mxu0
    %v209 = vadd.f32 %v149, %v208
    %v210 = vpop.f32.mrf.mxu0
    %211 = vdwg.mxu0
    %v212 = vmul.f32 %v209, 0.2
    %v213 = vmax.f32 %v209, %v212
    %v214 = vpack.c.bf16 %v213, %v213
    %v215 = vld [vmem:[#allocation8] sm:$0xf]
    %v216 = vld [vmem:[#allocation8 + $0x4] sm:$0xf]
    %v217 = vld [vmem:[#allocation8 + $0x8] sm:$0xf]
    %v218 = vld [vmem:[#allocation8 + $0xc] sm:$0xf]
    %v219 = vld [vmem:[#allocation8 + $0x10] sm:$0xf]
    %v220 = vld [vmem:[#allocation8 + $0x14] sm:$0xf]
    %v221 = vld [vmem:[#allocation8 + $0x18] sm:$0xf]
    %v222 = vld [vmem:[#allocation8 + $0x1c] sm:$0xf]
    %v223 = vld [vmem:[#allocation8 + $0x20] sm:$0xf]
    %v224 = vld [vmem:[#allocation8 + $0x24] sm:$0xf]
    %v225 = vld [vmem:[#allocation8 + $0x28] sm:$0xf]
    %v226 = vld [vmem:[#allocation8 + $0x2c] sm:$0xf]
    %v227 = vld [vmem:[#allocation8 + $0x30] sm:$0xf]
    %v228 = vld [vmem:[#allocation8 + $0x34] sm:$0xf]
    %v229 = vld [vmem:[#allocation8 + $0x38] sm:$0xf]
    %v230 = vld [vmem:[#allocation8 + $0x3c] sm:$0xf]
    %v231 = vld [vmem:[%s6] sm:$0x1]
    %v233 = vperm.slane %v231, 0
    %v251 = vunpack.c.l.b16 %v215
    %v252 = vunpack.c.l.b16 %v216
    %v253 = vunpack.c.l.b16 %v217
    %v254 = vunpack.c.l.b16 %v218
    %v255 = vunpack.c.l.b16 %v219
    %v256 = vunpack.c.l.b16 %v220
    %v257 = vunpack.c.l.b16 %v221
    %v258 = vunpack.c.l.b16 %v222
    %v259 = vunpack.c.l.b16 %v223
    %v260 = vunpack.c.l.b16 %v224
    %v261 = vunpack.c.l.b16 %v225
    %v262 = vunpack.c.l.b16 %v226
    %v263 = vunpack.c.l.b16 %v227
    %v264 = vunpack.c.l.b16 %v228
    %v265 = vunpack.c.l.b16 %v229
    %v266 = vunpack.c.l.b16 %v230
    %v267 = vpack.c.b16 %v252, %v251
    %v268 = vpack.c.b16 %v254, %v253
    %v269 = vpack.c.b16 %v256, %v255
    %v270 = vpack.c.b16 %v258, %v257
    %v271 = vpack.c.b16 %v260, %v259
    %v272 = vpack.c.b16 %v262, %v261
    %v273 = vpack.c.b16 %v264, %v263
    %v274 = vpack.c.b16 %v266, %v265
    %283 = vmatpush.bf16.msra.mxu0 %v274
    %284 = vmatpush.bf16.msra.mxu0 %v273
    %285 = vmatpush.bf16.msra.mxu0 %v272
    %286 = vmatpush.bf16.msra.mxu0 %v271
    %287 = vmatpush.bf16.msra.mxu0 %v270
    %288 = vmatpush.bf16.msra.mxu0 %v269
    %289 = vmatpush.bf16.msra.mxu0 %v268
    %290 = vmatpush.bf16.msra.mxu0 %v267
    %291 = vmatmul.bf16.gmra.mxu0 %v214
    %v292 = vpop.f32.mrf.mxu0
    %v293 = vadd.f32 %v233, %v292
    %v294 = vpop.f32.mrf.mxu0
    %295 = vdwg.mxu0
    %v296 = vtanh.pop %v293
    %v297 = vpack.c.bf16 %v296, %v296
    %298 = vst [vmem:[#allocation10] sm:$0xf] %v297
    // Predicated region
    $region46: #{tpu_custom_call.1} parent=1 // pred_check
      _
    $region47: #{tpu_custom_call.1} parent=1 // pred_check_branch
      %300 = sbr.rel (0) target = $region49
    $region48: #{tpu_custom_call.1} parent=1 // pred_region
      %302 = vsyncadd [#allocation4], 0
      %s304 = sshll.u32 [#allocation10], 4
      %s305 = int_to_ptr.vmem [resolvable:$true] %s304
      %s306 = sshll.u32 %s7, 4
      %s307 = int_to_ptr.hbm [resolvable:$true] %s306
      %309 = dma.vmem_to_hbm [thread:$0]  %s305, 64, %s307, [#allocation4]
    $region49: #{tpu_custom_call.1} parent=1 // pred_fallthru
      _
    // Predicated region
    $region50: #{tpu_custom_call.1} parent=1 // pred_check
      _
    $region51: #{tpu_custom_call.1} parent=1 // pred_check_branch
      %311 = sbr.rel (0) target = $region53
    $region52: #{tpu_custom_call.1} parent=1 // pred_region
      %313 = dma.done [#allocation4], 64
    $region53: #{tpu_custom_call.1} parent=1 // pred_fallthru
      _
    %314 = vsyncpa [#allocation3], 1
    %315 = vsyncpa [#allocation6], 1
    %316 = vsyncpa [#allocation9], 1
    %317 = vsyncpa [#allocation4], 1

// kernel: tpu_custom_call.1
$region0: #{tpu_custom_call.1}
  #allocation0 [shape = 'u32[]', space=smem, size = 0x4, offset = 0x4, fixed_abs, tag = 'smem constant byte address 0x4 - core index']
  #allocation1 [shape = 'u32[72,128]{1,0:T(1,128)}', space=vmem, size = 0x9000, scoped, tag = 'internal scratch']
  %s0 = inlined_call_operand.hbm [shape: f32[8,32], index: 0, kind: input, shape index: {}]
  %s1 = inlined_call_operand.hbm [shape: bf16[32,128], index: 1, kind: input, shape index: {}]
  %s2 = inlined_call_operand.vmem [shape: f32[1,128], index: 2, kind: input, shape index: {}]
  %s3 = inlined_call_operand.hbm [shape: bf16[128,128], index: 3, kind: input, shape index: {}]
  %s4 = inlined_call_operand.vmem [shape: f32[1,128], index: 4, kind: input, shape index: {}]
  %s5 = inlined_call_operand.hbm [shape: bf16[128,128], index: 5, kind: input, shape index: {}]
  %s6 = inlined_call_operand.vmem [shape: f32[1,128], index: 6, kind: input, shape index: {}]
  %s7 = inlined_call_operand.hbm [shape: bf16[8,128], index: 7, kind: output, shape index: {}]
  %s8 = sld [smem:[#allocation0]]
  $region54: #{tpu_custom_call.1} parent=0
    _
  %s10 = ssub.s32 1, %s8
  %s11 = scalar_select 0, %s10, %s8
  $region1: #{tpu_custom_call.1} parent=0
    #allocation2 [shape = 'u8[4096]{0}', space=vmem, size = 0x1000, scoped, tag = 'input window, operand 0, single buffered']
    #allocation3 [shape = 's32[1]{0}', space=sflag, size = 0x4, scoped, tag = 'scoped memory for tpu_custom_call.1']
    #allocation4 [shape = 's32[1]{0}', space=sflag, size = 0x4, scoped, tag = 'scoped memory for tpu_custom_call.1']
    #allocation5 [shape = 'u8[8192]{0}', space=vmem, size = 0x2000, scoped, tag = 'input window, operand 1, single buffered']
    #allocation6 [shape = 's32[1]{0}', space=sflag, size = 0x4, scoped, tag = 'scoped memory for tpu_custom_call.1']
    #allocation7 [shape = 'u8[32768]{0}', space=vmem, size = 0x8000, scoped, tag = 'input window, operand 3, single buffered']
    #allocation8 [shape = 'u8[32768]{0}', space=vmem, size = 0x8000, scoped, tag = 'input window, operand 5, single buffered']
    #allocation9 [shape = 's32[1]{0}', space=sflag, size = 0x4, scoped, tag = 'scoped memory for tpu_custom_call.1']
    #allocation10 [shape = 'u8[2048]{0}', space=vmem, size = 0x800, scoped, tag = 'output window, operand 0, single buffered']
    %12 = vsyncpa [#allocation3], 0
    %13 = vsyncpa [#allocation6], 0
    %14 = vsyncpa [#allocation9], 0
    %15 = vsyncpa [#allocation4], 0
    // Predicated region
    $region2: #{tpu_custom_call.1} parent=1 // pred_check
      _
    $region3: #{tpu_custom_call.1} parent=1 // pred_check_branch
      %17 = sbr.rel (0) target = $region5
    $region4: #{tpu_custom_call.1} parent=1 // pred_region
      %19 = vsyncadd [#allocation3], 0
      %s21 = sshll.u32 %s0, 4
      %s22 = int_to_ptr.hbm [resolvable:$true] %s21
      %s23 = sshll.u32 [#allocation2], 4
      %s24 = int_to_ptr.vmem [resolvable:$true] %s23
      %26 = dma.hbm_to_vmem [thread:$0]  %s22, 128, %s24, [#allocation3]
    $region5: #{tpu_custom_call.1} parent=1 // pred_fallthru
      _
    // Predicated region
    $region6: #{tpu_custom_call.1} parent=1 // pred_check
      _
    $region7: #{tpu_custom_call.1} parent=1 // pred_check_branch
      %28 = sbr.rel (0) target = $region9
    $region8: #{tpu_custom_call.1} parent=1 // pred_region
      %30 = vsyncadd [#allocation6], 0
      %s31 = sshll.u32 %s1, 4
      %s32 = int_to_ptr.hbm [resolvable:$true] %s31
      %s33 = sshll.u32 [#allocation5], 4
      %s34 = int_to_ptr.vmem [resolvable:$true] %s33
      %39 = dma.hbm_to_vmem [thread:$0]  %s32, 256, %s34, [#allocation6], 64, 64, 4
    $region9: #{tpu_custom_call.1} parent=1 // pred_fallthru
      _
    // Predicated region
    $region10: #{tpu_custom_call.1} parent=1 // pred_check
      _
    $region11: #{tpu_custom_call.1} parent=1 // pred_check_branch
      %41 = sbr.rel (0) target = $region13
    $region12: #{tpu_custom_call.1} parent=1 // pred_region
      _
    $region13: #{tpu_custom_call.1} parent=1 // pred_fallthru
      _
    // Predicated region
    $region14: #{tpu_custom_call.1} parent=1 // pred_check
      _
    $region15: #{tpu_custom_call.1} parent=1 // pred_check_branch
      %43 = sbr.rel (0) target = $region17
    $region16: #{tpu_custom_call.1} parent=1 // pred_region
      %45 = vsyncadd [#allocation6], 0
      %s46 = sshll.u32 %s3, 4
      %s47 = int_to_ptr.hbm [resolvable:$true] %s46
      %s48 = sshll.u32 [#allocation7], 4
      %s49 = int_to_ptr.vmem [resolvable:$true] %s48
      %54 = dma.hbm_to_vmem [thread:$0]  %s47, 1024, %s49, [#allocation6], 64, 64, 4
    $region17: #{tpu_custom_call.1} parent=1 // pred_fallthru
      _
    // Predicated region
    $region18: #{tpu_custom_call.1} parent=1 // pred_check
      _
    $region19: #{tpu_custom_call.1} parent=1 // pred_check_branch
      %56 = sbr.rel (0) target = $region21
    $region20: #{tpu_custom_call.1} parent=1 // pred_region
      _
    $region21: #{tpu_custom_call.1} parent=1 // pred_fallthru
      _
    // Predicated region
    $region22: #{tpu_custom_call.1} parent=1 // pred_check
      _
    $region23: #{tpu_custom_call.1} parent=1 // pred_check_branch
      %58 = sbr.rel (0) target = $region25
    $region24: #{tpu_custom_call.1} parent=1 // pred_region
      %60 = vsyncadd [#allocation9], 0
      %s61 = sshll.u32 %s5, 4
      %s62 = int_to_ptr.hbm [resolvable:$true] %s61
      %s63 = sshll.u32 [#allocation8], 4
      %s64 = int_to_ptr.vmem [resolvable:$true] %s63
      %69 = dma.hbm_to_vmem [thread:$0]  %s62, 1024, %s64, [#allocation9], 64, 64, 4
    $region25: #{tpu_custom_call.1} parent=1 // pred_fallthru
      _
    // Predicated region
    $region26: #{tpu_custom_call.1} parent=1 // pred_check
      _
    $region27: #{tpu_custom_call.1} parent=1 // pred_check_branch
      %71 = sbr.rel (0) target = $region29
    $region28: #{tpu_custom_call.1} parent=1 // pred_region
      _
    $region29: #{tpu_custom_call.1} parent=1 // pred_fallthru
      _
    // Predicated region
    $region30: #{tpu_custom_call.1} parent=1 // pred_check
      _
    $region31: #{tpu_custom_call.1} parent=1 // pred_check_branch
      %73 = sbr.rel (0) target = $region33
    $region32: #{tpu_custom_call.1} parent=1 // pred_region
      %75 = dma.done [#allocation3], 128
    $region33: #{tpu_custom_call.1} parent=1 // pred_fallthru
      _
    // Predicated region
    $region34: #{tpu_custom_call.1} parent=1 // pred_check
      _
    $region35: #{tpu_custom_call.1} parent=1 // pred_check_branch
      %77 = sbr.rel (0) target = $region37
    $region36: #{tpu_custom_call.1} parent=1 // pred_region
      %79 = dma.done [#allocation6], 256
    $region37: #{tpu_custom_call.1} parent=1 // pred_fallthru
      _
    // Predicated region
    $region38: #{tpu_custom_call.1} parent=1 // pred_check
      _
    $region39: #{tpu_custom_call.1} parent=1 // pred_check_branch
      %81 = sbr.rel (0) target = $region41
    $region40: #{tpu_custom_call.1} parent=1 // pred_region
      %83 = dma.done [#allocation6], 1024
    $region41: #{tpu_custom_call.1} parent=1 // pred_fallthru
      _
    // Predicated region
    $region42: #{tpu_custom_call.1} parent=1 // pred_check
      _
    $region43: #{tpu_custom_call.1} parent=1 // pred_check_branch
      %85 = sbr.rel (0) target = $region45
    $region44: #{tpu_custom_call.1} parent=1 // pred_region
      %87 = dma.done [#allocation9], 1024
    $region45: #{tpu_custom_call.1} parent=1 // pred_fallthru
      _
    %v89 = vld [vmem:[#allocation2] sm:$0xff]
    %v90 = vpack.c.bf16 %v89, %v89
    %v91 = vld [vmem:[#allocation5] sm:$0xf]
    %v92 = vld [vmem:[#allocation5 + $0x4] sm:$0xf]
    %v93 = vld [vmem:[#allocation5 + $0x8] sm:$0xf]
    %v94 = vld [vmem:[#allocation5 + $0xc] sm:$0xf]
    %v95 = vld [vmem:[%s2] sm:$0x1]
    %v97 = vperm.slane %v95, 0
    %v103 = vunpack.c.l.b16 %v91
    %v104 = vunpack.c.l.b16 %v92
    %v105 = vunpack.c.l.b16 %v93
    %v106 = vunpack.c.l.b16 %v94
    %v107 = vpack.c.b16 %v104, %v103
    %v108 = vpack.c.b16 %v106, %v105
    %vm111 = vcmask 261120
    %v113 = vsel %vm111, %v90, 0
    %115 = vmatpush.bf16.msra.mxu0 0
    %116 = vmatpush.bf16.msra.mxu0 0
    %117 = vmatpush.bf16.msra.mxu0 0
    %118 = vmatpush.bf16.msra.mxu0 0
    %119 = vmatpush.bf16.msra.mxu0 0
    %120 = vmatpush.bf16.msra.mxu0 0
    %121 = vmatpush.bf16.msra.mxu0 %v108
    %122 = vmatpush.bf16.msra.mxu0 %v107
    %123 = vmatmul.bf16.gmra.mxu0 %v113
    %v124 = vpop.f32.mrf.mxu0
    %v125 = vadd.f32 %v97, %v124
    %v126 = vpop.f32.mrf.mxu0
    %127 = vdwg.mxu0
    %v128 = vmul.f32 %v125, 0.2
    %v129 = vmax.f32 %v125, %v128
    %v130 = vpack.c.bf16 %v129, %v129
    %v131 = vld [vmem:[#allocation7] sm:$0xf]
    %v132 = vld [vmem:[#allocation7 + $0x4] sm:$0xf]
    %v133 = vld [vmem:[#allocation7 + $0x8] sm:$0xf]
    %v134 = vld [vmem:[#allocation7 + $0xc] sm:$0xf]
    %v135 = vld [vmem:[#allocation7 + $0x10] sm:$0xf]
    %v136 = vld [vmem:[#allocation7 + $0x14] sm:$0xf]
    %v137 = vld [vmem:[#allocation7 + $0x18] sm:$0xf]
    %v138 = vld [vmem:[#allocation7 + $0x1c] sm:$0xf]
    %v139 = vld [vmem:[#allocation7 + $0x20] sm:$0xf]
    %v140 = vld [vmem:[#allocation7 + $0x24] sm:$0xf]
    %v141 = vld [vmem:[#allocation7 + $0x28] sm:$0xf]
    %v142 = vld [vmem:[#allocation7 + $0x2c] sm:$0xf]
    %v143 = vld [vmem:[#allocation7 + $0x30] sm:$0xf]
    %v144 = vld [vmem:[#allocation7 + $0x34] sm:$0xf]
    %v145 = vld [vmem:[#allocation7 + $0x38] sm:$0xf]
    %v146 = vld [vmem:[#allocation7 + $0x3c] sm:$0xf]
    %v147 = vld [vmem:[%s4] sm:$0x1]
    %v149 = vperm.slane %v147, 0
    %v167 = vunpack.c.l.b16 %v131
    %v168 = vunpack.c.l.b16 %v132
    %v169 = vunpack.c.l.b16 %v133
    %v170 = vunpack.c.l.b16 %v134
    %v171 = vunpack.c.l.b16 %v135
    %v172 = vunpack.c.l.b16 %v136
    %v173 = vunpack.c.l.b16 %v137
    %v174 = vunpack.c.l.b16 %v138
    %v175 = vunpack.c.l.b16 %v139
    %v176 = vunpack.c.l.b16 %v140
    %v177 = vunpack.c.l.b16 %v141
    %v178 = vunpack.c.l.b16 %v142
    %v179 = vunpack.c.l.b16 %v143
    %v180 = vunpack.c.l.b16 %v144
    %v181 = vunpack.c.l.b16 %v145
    %v182 = vunpack.c.l.b16 %v146
    %v183 = vpack.c.b16 %v168, %v167
    %v184 = vpack.c.b16 %v170, %v169
    %v185 = vpack.c.b16 %v172, %v171
    %v186 = vpack.c.b16 %v174, %v173
    %v187 = vpack.c.b16 %v176, %v175
    %v188 = vpack.c.b16 %v178, %v177
    %v189 = vpack.c.b16 %v180, %v179
    %v190 = vpack.c.b16 %v182, %v181
    %199 = vmatpush.bf16.msra.mxu0 %v190
    %200 = vmatpush.bf16.msra.mxu0 %v189
    %201 = vmatpush.bf16.msra.mxu0 %v188
    %202 = vmatpush.bf16.msra.mxu0 %v187
    %203 = vmatpush.bf16.msra.mxu0 %v186
    %204 = vmatpush.bf16.msra.mxu0 %v185
    %205 = vmatpush.bf16.msra.mxu0 %v184
    %206 = vmatpush.bf16.msra.mxu0 %v183
    %207 = vmatmul.bf16.gmra.mxu0 %v130
    %v208 = vpop.f32.mrf.mxu0
    %v209 = vadd.f32 %v149, %v208
    %v210 = vpop.f32.mrf.mxu0
    %211 = vdwg.mxu0
    %v212 = vmul.f32 %v209, 0.2
    %v213 = vmax.f32 %v209, %v212
    %v214 = vpack.c.bf16 %v213, %v213
    %v215 = vld [vmem:[#allocation8] sm:$0xf]
    %v216 = vld [vmem:[#allocation8 + $0x4] sm:$0xf]
    %v217 = vld [vmem:[#allocation8 + $0x8] sm:$0xf]
    %v218 = vld [vmem:[#allocation8 + $0xc] sm:$0xf]
    %v219 = vld [vmem:[#allocation8 + $0x10] sm:$0xf]
    %v220 = vld [vmem:[#allocation8 + $0x14] sm:$0xf]
    %v221 = vld [vmem:[#allocation8 + $0x18] sm:$0xf]
    %v222 = vld [vmem:[#allocation8 + $0x1c] sm:$0xf]
    %v223 = vld [vmem:[#allocation8 + $0x20] sm:$0xf]
    %v224 = vld [vmem:[#allocation8 + $0x24] sm:$0xf]
    %v225 = vld [vmem:[#allocation8 + $0x28] sm:$0xf]
    %v226 = vld [vmem:[#allocation8 + $0x2c] sm:$0xf]
    %v227 = vld [vmem:[#allocation8 + $0x30] sm:$0xf]
    %v228 = vld [vmem:[#allocation8 + $0x34] sm:$0xf]
    %v229 = vld [vmem:[#allocation8 + $0x38] sm:$0xf]
    %v230 = vld [vmem:[#allocation8 + $0x3c] sm:$0xf]
    %v231 = vld [vmem:[%s6] sm:$0x1]
    %v233 = vperm.slane %v231, 0
    %v251 = vunpack.c.l.b16 %v215
    %v252 = vunpack.c.l.b16 %v216
    %v253 = vunpack.c.l.b16 %v217
    %v254 = vunpack.c.l.b16 %v218
    %v255 = vunpack.c.l.b16 %v219
    %v256 = vunpack.c.l.b16 %v220
    %v257 = vunpack.c.l.b16 %v221
    %v258 = vunpack.c.l.b16 %v222
    %v259 = vunpack.c.l.b16 %v223
    %v260 = vunpack.c.l.b16 %v224
    %v261 = vunpack.c.l.b16 %v225
    %v262 = vunpack.c.l.b16 %v226
    %v263 = vunpack.c.l.b16 %v227
    %v264 = vunpack.c.l.b16 %v228
    %v265 = vunpack.c.l.b16 %v229
    %v266 = vunpack.c.l.b16 %v230
    %v267 = vpack.c.b16 %v252, %v251
    %v268 = vpack.c.b16 %v254, %v253
    %v269 = vpack.c.b16 %v256, %v255
    %v270 = vpack.c.b16 %v258, %v257
    %v271 = vpack.c.b16 %v260, %v259
    %v272 = vpack.c.b16 %v262, %v261
    %v273 = vpack.c.b16 %v264, %v263
    %v274 = vpack.c.b16 %v266, %v265
    %283 = vmatpush.bf16.msra.mxu0 %v274
    %284 = vmatpush.bf16.msra.mxu0 %v273
    %285 = vmatpush.bf16.msra.mxu0 %v272
    %286 = vmatpush.bf16.msra.mxu0 %v271
    %287 = vmatpush.bf16.msra.mxu0 %v270
    %288 = vmatpush.bf16.msra.mxu0 %v269
    %289 = vmatpush.bf16.msra.mxu0 %v268
    %290 = vmatpush.bf16.msra.mxu0 %v267
    %291 = vmatmul.bf16.gmra.mxu0 %v214
    %v292 = vpop.f32.mrf.mxu0
    %v293 = vadd.f32 %v233, %v292
    %v294 = vpop.f32.mrf.mxu0
    %295 = vdwg.mxu0
    %v296 = vtanh.pop %v293
    %v297 = vpack.c.bf16 %v296, %v296
    %298 = vst [vmem:[#allocation10] sm:$0xf] %v297
    // Predicated region
    $region46: #{tpu_custom_call.1} parent=1 // pred_check
      _
    $region47: #{tpu_custom_call.1} parent=1 // pred_check_branch
      %300 = sbr.rel (0) target = $region49
    $region48: #{tpu_custom_call.1} parent=1 // pred_region
      %302 = vsyncadd [#allocation4], 0
      %s304 = sshll.u32 [#allocation10], 4
      %s305 = int_to_ptr.vmem [resolvable:$true] %s304
      %s306 = sshll.u32 %s7, 4
      %s307 = int_to_ptr.hbm [resolvable:$true] %s306
      %309 = dma.vmem_to_hbm [thread:$0]  %s305, 64, %s307, [#allocation4]
    $region49: #{tpu_custom_call.1} parent=1 // pred_fallthru
      _
    // Predicated region
    $region50: #{tpu_custom_call.1} parent=1 // pred_check
      _
    $region51: #{tpu_custom_call.1} parent=1 // pred_check_branch
      %311 = sbr.rel (0) target = $region53
    $region52: #{tpu_custom_call.1} parent=1 // pred_region
      %313 = dma.done [#allocation4], 64
    $region53: #{tpu_custom_call.1} parent=1 // pred_fallthru
      _
    %314 = vsyncpa [#allocation3], 1
    %315 = vsyncpa [#allocation6], 1
    %316 = vsyncpa [#allocation9], 1
    %317 = vsyncpa [#allocation4], 1

</llo_original>
